<compile_context>
chip_gen: v7x
topology: tpu7x:2x2x1
jax: 0.10.0
libtpu: 0.0.40
codegen_flags: <defaults>
</compile_context>

<pallas_src>
import functools
import math

import jax
import jax.numpy as jnp
from jax.experimental import pallas as pl
from jax.experimental.pallas import tpu as pltpu


LANE = 128                      # TPU lane width (classifier padded to 128 lanes)
VMEM_LIMIT = 48 * 1024 * 1024   # safe on v5e/v6e (128 MiB) and v7x (64 MiB)


def _compiler_params(n_parallel_axes):
    return pltpu.CompilerParams(
        dimension_semantics=("parallel",) * n_parallel_axes,
        vmem_limit_bytes=VMEM_LIMIT)


def _layernorm_f32(y, gamma, beta, eps):
    mu = jnp.mean(y, axis=-1, keepdims=True)
    var = jnp.mean(jnp.square(y - mu), axis=-1, keepdims=True)
    return (y - mu) * jax.lax.rsqrt(var + eps) * gamma + beta


# ----------------------------- Pallas kernels -----------------------------

def _embed_ln_kernel(we_ref, pe_ref, te_ref, g_ref, b_ref, o_ref, *, eps):
    # x = word_emb + pos_emb + type_emb(segment 0);  out = LayerNorm(x) in bf16
    x = we_ref[0] + pe_ref[...] + te_ref[...]                    # (S, H) f32
    o_ref[0] = _layernorm_f32(x, g_ref[...], b_ref[...], eps).astype(o_ref.dtype)


def embed_layernorm(word_vecs, pos_emb, type_vec, gamma, beta, eps=1e-12):
    """word_vecs: [B,S,H] f32, pos_emb: [S,H], type_vec/gamma/beta: [1,H] -> [B,S,H] bf16."""
    B, S, H = word_vecs.shape
    return pl.pallas_call(
        functools.partial(_embed_ln_kernel, eps=eps),
        out_shape=jax.ShapeDtypeStruct((B, S, H), jnp.bfloat16),
        grid=(B,),
        in_specs=[
            pl.BlockSpec((1, S, H), lambda b: (b, 0, 0)),
            pl.BlockSpec((S, H), lambda b: (0, 0)),
            pl.BlockSpec((1, H), lambda b: (0, 0)),
            pl.BlockSpec((1, H), lambda b: (0, 0)),
            pl.BlockSpec((1, H), lambda b: (0, 0)),
        ],
        out_specs=pl.BlockSpec((1, S, H), lambda b: (b, 0, 0)),
        compiler_params=_compiler_params(1),
    )(word_vecs, pos_emb, type_vec, gamma, beta)


def _encoder_layer_kernel(h_ref, mask_ref, wqkv_ref, bqkv_ref, wo_ref, bo_ref,
                          ln1g_ref, ln1b_ref, w1_ref, b1_ref, w2_ref, b2_ref,
                          ln2g_ref, ln2b_ref, *rest, n_heads, eps, with_logits):
    # One full BERT encoder layer for one batch element, entirely in VMEM.
    if with_logits:
        fcw_ref, fcb_ref, o_ref, logits_ref = rest
    else:
        (o_ref,) = rest

    x_bf = h_ref[0]                                   # (S, H) bf16
    x = x_bf.astype(jnp.float32)                      # residual path in f32
    S, H = x.shape
    Dh = H // n_heads
    mask = mask_ref[0]                                # (1, S) additive mask (f32)

    # --- fused QKV projection (scale 1/sqrt(Dh) already folded into Q weights)
    qkv = jnp.dot(x_bf, wqkv_ref[...],
                  preferred_element_type=jnp.float32) + bqkv_ref[...]   # (S, 3H)

    # --- per-head attention on the VMEM-resident tile (static head slices)
    ctx_heads = []
    for hd in range(n_heads):
        lo = hd * Dh
        qh = qkv[:, lo:lo + Dh].astype(jnp.bfloat16)                    # (S, Dh)
        kh = qkv[:, H + lo:H + lo + Dh].astype(jnp.bfloat16)
        vh = qkv[:, 2 * H + lo:2 * H + lo + Dh].astype(jnp.bfloat16)
        s = jax.lax.dot_general(qh, kh, (((1,), (1,)), ((), ())),
                                preferred_element_type=jnp.float32)      # (S, S)
        s = s + mask                                   # broadcast over query rows
        s = s - jnp.max(s, axis=-1, keepdims=True)
        p = jnp.exp(s)
        # approx reciprocal runs on the EUP slot; use exact divide for parity checks
        p = p * pl.reciprocal(jnp.sum(p, axis=-1, keepdims=True), approx=True)
        ctx_heads.append(jnp.dot(p.astype(jnp.bfloat16), vh,
                                 preferred_element_type=jnp.float32))    # (S, Dh)
    ctx = jnp.concatenate(ctx_heads, axis=-1)                            # (S, H)

    # --- attention output projection + residual + LayerNorm (f32 math)
    attn = jnp.dot(ctx.astype(jnp.bfloat16), wo_ref[...],
                   preferred_element_type=jnp.float32) + bo_ref[...]
    h1 = _layernorm_f32(attn + x, ln1g_ref[...], ln1b_ref[...], eps)

    # --- feed-forward: GELU fused, residual + LayerNorm fused
    ff = jnp.dot(h1.astype(jnp.bfloat16), w1_ref[...],
                 preferred_element_type=jnp.float32) + b1_ref[...]
    # TODO(synk): HF BERT uses exact erf-GELU; tanh-approx GELU used here
    # (erf lowering is not guaranteed in Mosaic).
    ff = jax.nn.gelu(ff)
    y2 = jnp.dot(ff.astype(jnp.bfloat16), w2_ref[...],
                 preferred_element_type=jnp.float32) + b2_ref[...]
    h2 = _layernorm_f32(y2 + h1, ln2g_ref[...], ln2b_ref[...], eps)

    o_ref[0] = h2.astype(o_ref.dtype)                  # bf16 inter-layer activations

    if with_logits:
        # [CLS] row -> classifier, fused into the last layer's epilogue
        cls = h2[0:1, :].astype(jnp.bfloat16)                            # (1, H)
        logits = jnp.dot(cls, fcw_ref[...],
                         preferred_element_type=jnp.float32) + fcb_ref[...]
        logits_ref[0] = logits.astype(logits_ref.dtype)


def encoder_layer(h, add_mask, lyr, n_heads, eps=1e-12, fc=None):
    """h: [B,S,H] bf16, add_mask: [B,1,S] f32. If fc=(fc_w,fc_b) also returns logits."""
    B, S, H = h.shape
    inter = lyr["w1"].shape[1]
    with_logits = fc is not None

    in_specs = [
        pl.BlockSpec((1, S, H), lambda b: (b, 0, 0)),      # h
        pl.BlockSpec((1, 1, S), lambda b: (b, 0, 0)),      # additive mask
        # TODO(synk): at real BERT sizes mark the constant-index weight blocks
        # pipeline_mode=pl.Buffered(1) to save VMEM on v7x (64 MiB).
        pl.BlockSpec((H, 3 * H), lambda b: (0, 0)),        # w_qkv
        pl.BlockSpec((1, 3 * H), lambda b: (0, 0)),        # b_qkv
        pl.BlockSpec((H, H), lambda b: (0, 0)),            # wo
        pl.BlockSpec((1, H), lambda b: (0, 0)),            # bo
        pl.BlockSpec((1, H), lambda b: (0, 0)),            # ln1_g
        pl.BlockSpec((1, H), lambda b: (0, 0)),            # ln1_b
        pl.BlockSpec((H, inter), lambda b: (0, 0)),        # w1
        pl.BlockSpec((1, inter), lambda b: (0, 0)),        # b1
        pl.BlockSpec((inter, H), lambda b: (0, 0)),        # w2
        pl.BlockSpec((1, H), lambda b: (0, 0)),            # b2
        pl.BlockSpec((1, H), lambda b: (0, 0)),            # ln2_g
        pl.BlockSpec((1, H), lambda b: (0, 0)),            # ln2_b
    ]
    args = [h, add_mask, lyr["w_qkv"], lyr["b_qkv"], lyr["wo"], lyr["bo"],
            lyr["ln1_g"], lyr["ln1_b"], lyr["w1"], lyr["b1"], lyr["w2"], lyr["b2"],
            lyr["ln2_g"], lyr["ln2_b"]]

    out_shape = jax.ShapeDtypeStruct((B, S, H), jnp.bfloat16)
    out_specs = pl.BlockSpec((1, S, H), lambda b: (b, 0, 0))
    if with_logits:
        fc_w, fc_b = fc
        in_specs += [pl.BlockSpec((H, LANE), lambda b: (0, 0)),
                     pl.BlockSpec((1, LANE), lambda b: (0, 0))]
        args += [fc_w, fc_b]
        out_shape = (out_shape, jax.ShapeDtypeStruct((B, 1, LANE), jnp.float32))
        out_specs = (out_specs, pl.BlockSpec((1, 1, LANE), lambda b: (b, 0, 0)))

    kern = functools.partial(_encoder_layer_kernel, n_heads=n_heads, eps=eps,
                             with_logits=with_logits)
    return pl.pallas_call(
        kern,
        out_shape=out_shape,
        grid=(B,),
        in_specs=in_specs,
        out_specs=out_specs,
        compiler_params=_compiler_params(1),
    )(*args)


# ----------------------------- Model (glue + kernels) -----------------------------

def init_params(key, vocab, max_pos, hidden, n_layers, n_heads, intermediate,
                num_classes):
    std = 0.02
    scale = 1.0 / math.sqrt(hidden // n_heads)
    keys = jax.random.split(key, 4 + n_layers)
    fc_w = jax.random.normal(keys[3], (hidden, num_classes), jnp.float32) * std
    # lane-dense classifier: pad output dim to 128 lanes, slice in the wrapper.
    fc_w_pad = jnp.zeros((hidden, LANE), jnp.float32).at[:, :num_classes].set(fc_w)
    params = {
        "word_emb": jax.random.normal(keys[0], (vocab, hidden), jnp.float32) * std,
        "pos_emb": jax.random.normal(keys[1], (max_pos, hidden), jnp.float32) * std,
        "type_emb": jax.random.normal(keys[2], (2, hidden), jnp.float32) * std,
        "emb_ln_g": jnp.ones((1, hidden), jnp.float32),
        "emb_ln_b": jnp.zeros((1, hidden), jnp.float32),
        # self.fc = nn.Linear(768, num_classes)  (scaled-down hidden here)
        "fc_w_pad": fc_w_pad.astype(jnp.bfloat16),
        "fc_b_pad": jnp.zeros((1, LANE), jnp.float32),
        "num_classes": num_classes,
        "n_heads": n_heads,
        "layers": [],
    }
    for l in range(n_layers):
        lk = jax.random.split(keys[4 + l], 6)
        wq = jax.random.normal(lk[0], (hidden, hidden), jnp.float32) * std
        wk = jax.random.normal(lk[1], (hidden, hidden), jnp.float32) * std
        wv = jax.random.normal(lk[2], (hidden, hidden), jnp.float32) * std
        layer = {
            # fused QKV weight [H, 3H]; 1/sqrt(Dh) folded into the Q columns
            # (the q bias slice would be scaled identically; it is zero here).
            "w_qkv": jnp.concatenate([wq * scale, wk, wv], axis=1).astype(jnp.bfloat16),
            "b_qkv": jnp.zeros((1, 3 * hidden), jnp.float32),
            "wo": (jax.random.normal(lk[3], (hidden, hidden), jnp.float32)
                   * std).astype(jnp.bfloat16),
            "bo": jnp.zeros((1, hidden), jnp.float32),
            "ln1_g": jnp.ones((1, hidden), jnp.float32),
            "ln1_b": jnp.zeros((1, hidden), jnp.float32),
            "w1": (jax.random.normal(lk[4], (hidden, intermediate), jnp.float32)
                   * std).astype(jnp.bfloat16),
            "b1": jnp.zeros((1, intermediate), jnp.float32),
            "w2": (jax.random.normal(lk[5], (intermediate, hidden), jnp.float32)
                   * std).astype(jnp.bfloat16),
            "b2": jnp.zeros((1, hidden), jnp.float32),
            "ln2_g": jnp.ones((1, hidden), jnp.float32),
            "ln2_b": jnp.zeros((1, hidden), jnp.float32),
        }
        params["layers"].append(layer)
    return params


def bert_classification_forward(params, input_ids, attention_mask):
    """Equivalent of:  out = BertModel(ids, mask)[0][:, 0, :];  logits = fc(out)."""
    B, S = input_ids.shape
    nH = params["n_heads"]

    # --- embeddings: gathers in XLA glue; sum + LayerNorm in one Pallas kernel
    word_vecs = params["word_emb"][input_ids]                     # [B, S, H] f32
    pos = params["pos_emb"][:S]                                   # [S, H]
    type0 = params["type_emb"][0:1]                               # [1, H] (all segment 0)
    h = embed_layernorm(word_vecs, pos, type0,
                        params["emb_ln_g"], params["emb_ln_b"])   # [B, S, H] bf16

    # BERT extended attention mask: (1 - mask) * -10000, broadcast over heads/queries
    add_mask = ((1.0 - attention_mask.astype(jnp.float32)) * -10000.0).reshape(B, 1, S)

    logits_pad = None
    n_layers = len(params["layers"])
    for li, lyr in enumerate(params["layers"]):
        is_last = li == n_layers - 1
        fc = (params["fc_w_pad"], params["fc_b_pad"]) if is_last else None
        out = encoder_layer(h, add_mask, lyr, nH, fc=fc)
        if is_last:
            h, logits_pad = out                                   # [CLS]+fc fused in last layer
        else:
            h = out

    # self.fc(outputs): slice lane-padded logits back to num_classes
    return logits_pad.reshape(B, LANE)[:, :params["num_classes"]]


# ----------------------------- main -----------------------------

if __name__ == "__main__":
    B, S = 2, 8
    VOCAB, MAX_POS = 64, 16
    HIDDEN, N_LAYERS, N_HEADS, INTER = 128, 2, 4, 256
    NUM_CLASSES = 4

    root = jax.random.PRNGKey(0)
    pkey, ikey = jax.random.split(root)

    params = init_params(pkey, VOCAB, MAX_POS, HIDDEN, N_LAYERS, N_HEADS, INTER,
                         NUM_CLASSES)
    input_ids = jax.random.randint(ikey, (B, S), 0, VOCAB, dtype=jnp.int32)
    attention_mask = jnp.array([[1, 1, 1, 1, 1, 1, 1, 1],
                                [1, 1, 1, 1, 1, 1, 0, 0]], dtype=jnp.int32)

    logits = bert_classification_forward(params, input_ids, attention_mask)
    logits = jax.block_until_ready(logits)

    assert logits.shape == (B, NUM_CLASSES) and logits.dtype == jnp.float32
    assert bool(jnp.all(jnp.isfinite(logits)))
    print("KERNEL_OK")
</pallas_src>

<mosaic_0001>
module attributes {stable_mosaic.version = 11 : i64} {
  func.func @_embed_ln_kernel(%arg0: i32, %arg1: memref<1x8x128xf32, #tpu.memory_space<vmem>>, %arg2: memref<8x128xf32, #tpu.memory_space<vmem>>, %arg3: memref<1x128xf32, #tpu.memory_space<vmem>>, %arg4: memref<1x128xf32, #tpu.memory_space<vmem>>, %arg5: memref<1x128xf32, #tpu.memory_space<vmem>>, %arg6: memref<1x8x128xbf16, #tpu.memory_space<vmem>>) attributes {dimension_semantics = [#tpu.dimension_semantics<parallel>], iteration_bounds = array<i64: 2>, scalar_prefetch = 0 : i64, scratch_operands = 0 : i64, tpu.core_type = #tpu.core_type<tc>, window_params = [{transform_indices = @transform_0, window_bounds = array<i64: 1, 8, 128>}, {pipeline_mode = #tpu.pipeline_mode<synchronous>, transform_indices = @transform_1, window_bounds = array<i64: 8, 128>}, {pipeline_mode = #tpu.pipeline_mode<synchronous>, transform_indices = @transform_2, window_bounds = array<i64: 1, 128>}, {pipeline_mode = #tpu.pipeline_mode<synchronous>, transform_indices = @transform_3, window_bounds = array<i64: 1, 128>}, {pipeline_mode = #tpu.pipeline_mode<synchronous>, transform_indices = @transform_4, window_bounds = array<i64: 1, 128>}, {transform_indices = @transform_5, window_bounds = array<i64: 1, 8, 128>}]} {
    %c0 = arith.constant 0 : index
    %c0_0 = arith.constant 0 : index
    %c0_1 = arith.constant 0 : index
    %0 = vector.load %arg1[%c0, %c0_0, %c0_1] : memref<1x8x128xf32, #tpu.memory_space<vmem>>, vector<1x8x128xf32>
    %1 = vector.shape_cast %0 : vector<1x8x128xf32> to vector<8x128xf32>
    %c0_2 = arith.constant 0 : index
    %c0_3 = arith.constant 0 : index
    %2 = vector.load %arg2[%c0_2, %c0_3] : memref<8x128xf32, #tpu.memory_space<vmem>>, vector<8x128xf32>
    %3 = arith.addf %1, %2 : vector<8x128xf32>
    %c0_4 = arith.constant 0 : index
    %c0_5 = arith.constant 0 : index
    %4 = vector.load %arg3[%c0_4, %c0_5] : memref<1x128xf32, #tpu.memory_space<vmem>>, vector<1x128xf32>
    %5 = vector.broadcast %4 : vector<1x128xf32> to vector<8x128xf32>
    %6 = arith.addf %3, %5 : vector<8x128xf32>
    %c0_6 = arith.constant 0 : index
    %c0_7 = arith.constant 0 : index
    %7 = vector.load %arg4[%c0_6, %c0_7] : memref<1x128xf32, #tpu.memory_space<vmem>>, vector<1x128xf32>
    %c0_8 = arith.constant 0 : index
    %c0_9 = arith.constant 0 : index
    %8 = vector.load %arg5[%c0_8, %c0_9] : memref<1x128xf32, #tpu.memory_space<vmem>>, vector<1x128xf32>
    %cst = arith.constant dense<0.000000e+00> : vector<8xf32>
    %9 = vector.multi_reduction <add>, %6, %cst [1] : vector<8x128xf32> to vector<8xf32>
    %10 = vector.shape_cast %9 : vector<8xf32> to vector<8x1xf32>
    %cst_10 = arith.constant 1.280000e+02 : f32
    %11 = vector.broadcast %cst_10 : f32 to vector<8x1xf32>
    %12 = arith.divf %10, %11 : vector<8x1xf32>
    %13 = vector.broadcast %12 : vector<8x1xf32> to vector<8x128xf32>
    %14 = arith.subf %6, %13 : vector<8x128xf32>
    %15 = arith.mulf %14, %14 : vector<8x128xf32>
    %cst_11 = arith.constant dense<0.000000e+00> : vector<8xf32>
    %16 = vector.multi_reduction <add>, %15, %cst_11 [1] : vector<8x128xf32> to vector<8xf32>
    %17 = vector.shape_cast %16 : vector<8xf32> to vector<8x1xf32>
    %cst_12 = arith.constant 1.280000e+02 : f32
    %18 = vector.broadcast %cst_12 : f32 to vector<8x1xf32>
    %19 = arith.divf %17, %18 : vector<8x1xf32>
    %20 = vector.broadcast %12 : vector<8x1xf32> to vector<8x128xf32>
    %21 = arith.subf %6, %20 : vector<8x128xf32>
    %cst_13 = arith.constant 9.99999996E-13 : f32
    %22 = vector.broadcast %cst_13 : f32 to vector<8x1xf32>
    %23 = arith.addf %19, %22 : vector<8x1xf32>
    %24 = math.rsqrt %23 : vector<8x1xf32>
    %25 = vector.broadcast %24 : vector<8x1xf32> to vector<8x128xf32>
    %26 = arith.mulf %21, %25 : vector<8x128xf32>
    %27 = vector.broadcast %7 : vector<1x128xf32> to vector<8x128xf32>
    %28 = arith.mulf %26, %27 : vector<8x128xf32>
    %29 = vector.broadcast %8 : vector<1x128xf32> to vector<8x128xf32>
    %30 = arith.addf %28, %29 : vector<8x128xf32>
    %31 = arith.truncf %30 : vector<8x128xf32> to vector<8x128xbf16>
    %c0_14 = arith.constant 0 : index
    %c0_15 = arith.constant 0 : index
    %c0_16 = arith.constant 0 : index
    %32 = vector.load %arg6[%c0_14, %c0_15, %c0_16] : memref<1x8x128xbf16, #tpu.memory_space<vmem>>, vector<1x8x128xbf16>
    %33 = vector.shape_cast %32 : vector<1x8x128xbf16> to vector<8x128xbf16>
    %34 = vector.shape_cast %31 : vector<8x128xbf16> to vector<1x8x128xbf16>
    tpu.vector_store %arg6[%c0_14, %c0_15, %c0_16], %34 {strides = array<i32>} : memref<1x8x128xbf16, #tpu.memory_space<vmem>>, vector<1x8x128xbf16>,
    return
  }
  func.func @transform_0(%arg0: i32) -> (i32, i32, i32) {
    %c0_i32 = arith.constant 0 : i32
    %c0_i32_0 = arith.constant 0 : i32
    %c0_i32_1 = arith.constant 0 : i32
    return %arg0, %c0_i32, %c0_i32_0 : i32, i32, i32
  }
  func.func @transform_1(%arg0: i32) -> (i32, i32) {
    %c0_i32 = arith.constant 0 : i32
    %c0_i32_0 = arith.constant 0 : i32
    %c0_i32_1 = arith.constant 0 : i32
    return %c0_i32, %c0_i32_0 : i32, i32
  }
  func.func @transform_2(%arg0: i32) -> (i32, i32) {
    %c0_i32 = arith.constant 0 : i32
    %c0_i32_0 = arith.constant 0 : i32
    %c0_i32_1 = arith.constant 0 : i32
    return %c0_i32, %c0_i32_0 : i32, i32
  }
  func.func @transform_3(%arg0: i32) -> (i32, i32) {
    %c0_i32 = arith.constant 0 : i32
    %c0_i32_0 = arith.constant 0 : i32
    %c0_i32_1 = arith.constant 0 : i32
    return %c0_i32, %c0_i32_0 : i32, i32
  }
  func.func @transform_4(%arg0: i32) -> (i32, i32) {
    %c0_i32 = arith.constant 0 : i32
    %c0_i32_0 = arith.constant 0 : i32
    %c0_i32_1 = arith.constant 0 : i32
    return %c0_i32, %c0_i32_0 : i32, i32
  }
  func.func @transform_5(%arg0: i32) -> (i32, i32, i32) {
    %c0_i32 = arith.constant 0 : i32
    %c0_i32_0 = arith.constant 0 : i32
    %c0_i32_1 = arith.constant 0 : i32
    return %arg0, %c0_i32, %c0_i32_0 : i32, i32, i32
  }
}

</mosaic_0001>

<llo_original>
// kernel: tpu_custom_call.1
$region0: #{tpu_custom_call.1}
  #allocation0 [shape = 'u32[]', space=smem, size = 0x4, offset = 0x4, fixed_abs, tag = 'smem constant byte address 0x4 - core index']
  #allocation1 [shape = 'u32[144,128]{1,0:T(1,128)}', space=vmem, size = 0x12000, scoped, tag = 'internal scratch']
  %s0 = inlined_call_operand.hbm [shape: f32[2,8,128], index: 0, kind: input, shape index: {}]
  %s1 = inlined_call_operand.hbm [shape: f32[8,128], index: 1, kind: input, shape index: {}]
  %s2 = inlined_call_operand.vmem [shape: f32[1,128], index: 2, kind: input, shape index: {}]
  %s3 = inlined_call_operand.vmem [shape: f32[1,128], index: 3, kind: input, shape index: {}]
  %s4 = inlined_call_operand.vmem [shape: f32[1,128], index: 4, kind: input, shape index: {}]
  %s5 = inlined_call_operand.hbm [shape: bf16[2,8,128], index: 5, kind: output, shape index: {}]
  %s6 = sld [smem:[#allocation0]]
  $region61: #{tpu_custom_call.1} parent=0
    _
  %s8 = ssub.s32 1, %s6
  %s9 = scalar_select 0, %s8, %s6
  $region1: #{tpu_custom_call.1} parent=0
    #allocation2 [shape = 'u8[8192]{0}', space=vmem, size = 0x2000, scoped, tag = 'input window, operand 0']
    #allocation3 [shape = 's32[2]{0}', space=sflag, size = 0x8, scoped, tag = 'scoped memory for tpu_custom_call.1']
    #allocation4 [shape = 's32[2]{0}', space=sflag, size = 0x8, scoped, tag = 'scoped memory for tpu_custom_call.1']
    #allocation5 [shape = 'u8[4096]{0}', space=vmem, size = 0x1000, scoped, tag = 'input window, operand 1, single buffered']
    #allocation6 [shape = 's32[1]{0}', space=sflag, size = 0x4, scoped, tag = 'scoped memory for tpu_custom_call.1']
    #allocation7 [shape = 'u8[4096]{0}', space=vmem, size = 0x1000, scoped, tag = 'output window, operand 0']
    %10 = vsyncpa [#allocation3], 0
    %s11 = scalar_lea.sflag [#allocation3], 1
    %12 = vsyncpa %s11, 0
    %13 = vsyncpa [#allocation6], 0
    %14 = vsyncpa [#allocation4], 0
    %s15 = scalar_lea.sflag [#allocation4], 1
    %16 = vsyncpa %s15, 0
    loop: start=0, step=1, limit=4
    $region2: #{tpu_custom_call.1} parent=1 // loop_pre_header
      _
    $region3: #{tpu_custom_call.1} parent=1 // loop_header
      %s18 = sphi 0, %s22
      %p19 = scmp.ge.s32.totalorder %s18, 4
      %s28 = sphi 0, %s30
      %s31 = sphi 0, %s28
      %s32 = sphi 0, %s31
      %s48 = sphi 0, %s32
      %s52 = sphi 0, %s52
      %s54 = sphi 0, %s52
      %s55 = sphi 0, %s54
      %s69 = sphi 0, %s55
      %s73 = sphi 0, %s73
      %s75 = sphi 0, %s73
      %s76 = sphi 0, %s75
      %s90 = sphi 0, %s76
      %s94 = sphi 0, %s94
      %s96 = sphi 0, %s94
      %s97 = sphi 0, %s96
      %s111 = sphi 0, %s97
      %s115 = sphi 0, %s115
      %s117 = sphi 0, %s115
      %s118 = sphi 0, %s117
      %s132 = sphi 0, %s118
      %s138 = sphi 0, %s140
      %s141 = sphi 0, %s138
      %s142 = sphi 0, %s141
      %s158 = sphi 0, %s142
    $region4: #{tpu_custom_call.1} parent=1 // loop_header_branch
      %21 = sbr.rel (%p19) target = $region8
    $region5: #{tpu_custom_call.1} parent=1 // loop_body
      %s23 = ssub.s32 %s18, 1
      %s24 = ssub.s32 %s18, 2
      %s25 = sadd.s32 %s18, 1
      %s26 = ssub.s32 %s18, %s25
      %p27 = scmp.eq.s32.totalorder %s26, 0
      %s29 = sadd.s32 %s28, 1
      %s30 = scalar_select %p27, %s28, %s29
      %p33 = pneg %p27
      %p34 = scmp.eq.s32.totalorder %s18, 1
      %p35 = por %p33, %p34
      %p36 = scmp.ne.s32.totalorder %s28, %s31
      %p37 = scmp.eq.s32.totalorder %s18, 0
      %p38 = por %p36, %p37
      %p39 = scmp.ne.s32.totalorder %s28, %s31
      %p40 = scmp.eq.s32.totalorder %s23, 1
      %p41 = por %p39, %p40
      %p42 = scmp.ne.s32.totalorder %s31, %s32
      %p43 = scmp.eq.s32.totalorder %s23, 0
      %p44 = por %p42, %p43
      %p45 = scmp.ne.s32.totalorder %s31, %s32
      %p46 = scmp.eq.s32.totalorder %s24, 1
      %p47 = por %p45, %p46
      %p49 = scmp.ne.s32.totalorder %s32, %s48
      %p50 = scmp.eq.s32.totalorder %s24, 0
      %p51 = por %p49, %p50
      %s53 = sadd.s32 %s52, 1
      %p56 = scmp.eq.s32.totalorder %s18, 1
      %p57 = scmp.ne.s32.totalorder %s52, %s54
      %p58 = scmp.eq.s32.totalorder %s18, 0
      %p59 = por %p57, %p58
      %p60 = scmp.ne.s32.totalorder %s52, %s54
      %p61 = scmp.eq.s32.totalorder %s23, 1
      %p62 = por %p60, %p61
      %p63 = scmp.ne.s32.totalorder %s54, %s55
      %p64 = scmp.eq.s32.totalorder %s23, 0
      %p65 = por %p63, %p64
      %p66 = scmp.ne.s32.totalorder %s54, %s55
      %p67 = scmp.eq.s32.totalorder %s24, 1
      %p68 = por %p66, %p67
      %p70 = scmp.ne.s32.totalorder %s55, %s69
      %p71 = scmp.eq.s32.totalorder %s24, 0
      %p72 = por %p70, %p71
      %s74 = sadd.s32 %s73, 1
      %p77 = scmp.eq.s32.totalorder %s18, 1
      %p78 = scmp.ne.s32.totalorder %s73, %s75
      %p79 = scmp.eq.s32.totalorder %s18, 0
      %p80 = por %p78, %p79
      %p81 = scmp.ne.s32.totalorder %s73, %s75
      %p82 = scmp.eq.s32.totalorder %s23, 1
      %p83 = por %p81, %p82
      %p84 = scmp.ne.s32.totalorder %s75, %s76
      %p85 = scmp.eq.s32.totalorder %s23, 0
      %p86 = por %p84, %p85
      %p87 = scmp.ne.s32.totalorder %s75, %s76
      %p88 = scmp.eq.s32.totalorder %s24, 1
      %p89 = por %p87, %p88
      %p91 = scmp.ne.s32.totalorder %s76, %s90
      %p92 = scmp.eq.s32.totalorder %s24, 0
      %p93 = por %p91, %p92
      %s95 = sadd.s32 %s94, 1
      %p98 = scmp.eq.s32.totalorder %s18, 1
      %p99 = scmp.ne.s32.totalorder %s94, %s96
      %p100 = scmp.eq.s32.totalorder %s18, 0
      %p101 = por %p99, %p100
      %p102 = scmp.ne.s32.totalorder %s94, %s96
      %p103 = scmp.eq.s32.totalorder %s23, 1
      %p104 = por %p102, %p103
      %p105 = scmp.ne.s32.totalorder %s96, %s97
      %p106 = scmp.eq.s32.totalorder %s23, 0
      %p107 = por %p105, %p106
      %p108 = scmp.ne.s32.totalorder %s96, %s97
      %p109 = scmp.eq.s32.totalorder %s24, 1
      %p110 = por %p108, %p109
      %p112 = scmp.ne.s32.totalorder %s97, %s111
      %p113 = scmp.eq.s32.totalorder %s24, 0
      %p114 = por %p112, %p113
      %s116 = sadd.s32 %s115, 1
      %p119 = scmp.eq.s32.totalorder %s18, 1
      %p120 = scmp.ne.s32.totalorder %s115, %s117
      %p121 = scmp.eq.s32.totalorder %s18, 0
      %p122 = por %p120, %p121
      %p123 = scmp.ne.s32.totalorder %s115, %s117
      %p124 = scmp.eq.s32.totalorder %s23, 1
      %p125 = por %p123, %p124
      %p126 = scmp.ne.s32.totalorder %s117, %s118
      %p127 = scmp.eq.s32.totalorder %s23, 0
      %p128 = por %p126, %p127
      %p129 = scmp.ne.s32.totalorder %s117, %s118
      %p130 = scmp.eq.s32.totalorder %s24, 1
      %p131 = por %p129, %p130
      %p133 = scmp.ne.s32.totalorder %s118, %s132
      %p134 = scmp.eq.s32.totalorder %s24, 0
      %p135 = por %p133, %p134
      %s136 = ssub.s32 %s18, %s25
      %p137 = scmp.eq.s32.totalorder %s136, 0
      %s139 = sadd.s32 %s138, 1
      %s140 = scalar_select %p137, %s138, %s139
      %p143 = pneg %p137
      %p144 = scmp.eq.s32.totalorder %s18, 1
      %p145 = por %p143, %p144
      %p146 = scmp.ne.s32.totalorder %s138, %s141
      %p147 = scmp.eq.s32.totalorder %s18, 0
      %p148 = por %p146, %p147
      %p149 = scmp.ne.s32.totalorder %s138, %s141
      %p150 = scmp.eq.s32.totalorder %s23, 1
      %p151 = por %p149, %p150
      %p152 = scmp.ne.s32.totalorder %s141, %s142
      %p153 = scmp.eq.s32.totalorder %s23, 0
      %p154 = por %p152, %p153
      %p155 = scmp.ne.s32.totalorder %s141, %s142
      %p156 = scmp.eq.s32.totalorder %s24, 1
      %p157 = por %p155, %p156
      %p159 = scmp.ne.s32.totalorder %s142, %s158
      %p160 = scmp.eq.s32.totalorder %s24, 0
      %p161 = por %p159, %p160
      %p162 = scmp.le.s32.totalorder 1, %s18
      %p163 = scmp.lt.s32.totalorder %s18, 3
      %p164 = pnand %p162, %p163
      %p165 = pneg %p164
      // Predicated region
      $region9: #{tpu_custom_call.1} parent=5 // pred_check
        _
      $region10: #{tpu_custom_call.1} parent=5 // pred_check_branch
        %167 = sbr.rel (%p164) target = $region12
      $region11: #{tpu_custom_call.1} parent=5 // pred_region
        %s168 = ssub.s32 %s18, 1
        // Predicated region
        $region13: #{tpu_custom_call.1} parent=11 // pred_check
          %p169 = pneg %p65
        $region14: #{tpu_custom_call.1} parent=11 // pred_check_branch
          %171 = sbr.rel (%p169) target = $region16
        $region15: #{tpu_custom_call.1} parent=11 // pred_region
          %s173 = ssub.s32 128, 128
          %174 = vsyncadd [#allocation6], %s173
          %s176 = sshll.u32 [#allocation5], 4
          %s177 = int_to_ptr.vmem [resolvable:$true] %s176
          %179 = dma.hbm_to_vmem [thread:$0]  %s1, 128, %s177, [#allocation6]
        $region16: #{tpu_custom_call.1} parent=11 // pred_fallthru
          _
        // Predicated region
        $region17: #{tpu_custom_call.1} parent=11 // pred_check
          %p180 = pneg %p86
        $region18: #{tpu_custom_call.1} parent=11 // pred_check_branch
          %182 = sbr.rel (%p180) target = $region20
        $region19: #{tpu_custom_call.1} parent=11 // pred_region
          _
        $region20: #{tpu_custom_call.1} parent=11 // pred_fallthru
          _
        // Predicated region
        $region21: #{tpu_custom_call.1} parent=11 // pred_check
          %p183 = pneg %p107
        $region22: #{tpu_custom_call.1} parent=11 // pred_check_branch
          %185 = sbr.rel (%p183) target = $region24
        $region23: #{tpu_custom_call.1} parent=11 // pred_region
          _
        $region24: #{tpu_custom_call.1} parent=11 // pred_fallthru
          _
        // Predicated region
        $region25: #{tpu_custom_call.1} parent=11 // pred_check
          %p186 = pneg %p128
        $region26: #{tpu_custom_call.1} parent=11 // pred_check_branch
          %188 = sbr.rel (%p186) target = $region28
        $region27: #{tpu_custom_call.1} parent=11 // pred_region
          _
        $region28: #{tpu_custom_call.1} parent=11 // pred_fallthru
          _
      $region12: #{tpu_custom_call.1} parent=5 // pred_fallthru
        _
      %p189 = scmp.lt.s32.totalorder %s18, 2
      // Predicated region
      $region29: #{tpu_custom_call.1} parent=5 // pred_check
        %p190 = pneg %p189
      $region30: #{tpu_custom_call.1} parent=5 // pred_check_branch
        %192 = sbr.rel (%p190) target = $region32
      $region31: #{tpu_custom_call.1} parent=5 // pred_region
        // Predicated region
        $region33: #{tpu_custom_call.1} parent=31 // pred_check
          %p193 = pneg %p38
        $region34: #{tpu_custom_call.1} parent=31 // pred_check_branch
          %195 = sbr.rel (%p193) target = $region36
        $region35: #{tpu_custom_call.1} parent=31 // pred_region
          %s196 = sand.u32 %s28, 1
          %s197 = scalar_lea.sflag [#allocation3], %s196
          %s198 = sand.u32 %s28, 1
          %s199 = smul.addr %s198, 8
          %s200 = scalar_lea.vmem [#allocation2], %s199
          %s202 = ssub.s32 128, 128
          %203 = vsyncadd %s197, %s202
          %s204 = smul.addr %s18, 128
          %s205 = scalar_lea.hbm %s0, %s204
          %s207 = sshll.u32 %s200, 4
          %s208 = int_to_ptr.vmem [resolvable:$true] %s207
          %210 = dma.hbm_to_vmem [thread:$0]  %s205, 128, %s208, %s197
        $region36: #{tpu_custom_call.1} parent=31 // pred_fallthru
          _
      $region32: #{tpu_custom_call.1} parent=5 // pred_fallthru
        _
      %p211 = scmp.le.s32.totalorder 1, %s18
      %p212 = scmp.lt.s32.totalorder %s18, 3
      %p213 = pnand %p211, %p212
      %p214 = pneg %p213
      // Predicated region
      $region37: #{tpu_custom_call.1} parent=5 // pred_check
        _
      $region38: #{tpu_custom_call.1} parent=5 // pred_check_branch
        %216 = sbr.rel (%p213) target = $region40
      $region39: #{tpu_custom_call.1} parent=5 // pred_region
        %s217 = ssub.s32 %s18, 1
        %s218 = sand.u32 %s31, 1
        %s219 = scalar_lea.sflag [#allocation3], %s218
        %s220 = sand.u32 %s31, 1
        %s221 = smul.addr %s220, 8
        %s222 = scalar_lea.vmem [#allocation2], %s221
        // Predicated region
        $region41: #{tpu_custom_call.1} parent=39 // pred_check
          %p223 = pneg %p44
        $region42: #{tpu_custom_call.1} parent=39 // pred_check_branch
          %225 = sbr.rel (%p223) target = $region44
        $region43: #{tpu_custom_call.1} parent=39 // pred_region
          %226 = dma.done %s219, 128
        $region44: #{tpu_custom_call.1} parent=39 // pred_fallthru
          _
        // Predicated region
        $region45: #{tpu_custom_call.1} parent=39 // pred_check
          %p227 = pneg %p65
        $region46: #{tpu_custom_call.1} parent=39 // pred_check_branch
          %229 = sbr.rel (%p227) target = $region48
        $region47: #{tpu_custom_call.1} parent=39 // pred_region
          %230 = dma.done [#allocation6], 128
        $region48: #{tpu_custom_call.1} parent=39 // pred_fallthru
          _
        %s231 = sand.u32 %s31, 1
        %s232 = scalar_lea.sflag [#allocation3], %s231
        %s233 = sand.u32 %s31, 1
        %s234 = smul.addr %s233, 8
        %s235 = scalar_lea.vmem [#allocation2], %s234
        %p236 = pneg %p44
        %p237 = pneg %p41
        %p238 = pneg %p65
        %p239 = pneg %p62
        %p240 = pneg %p86
        %p241 = pneg %p83
        %p242 = pneg %p107
        %p243 = pneg %p104
        %p244 = pneg %p128
        %p245 = pneg %p125
        %p246 = pneg %p154
        %p247 = pneg %p151
        %s248 = sand.u32 %s141, 1
        %s249 = scalar_lea.sflag [#allocation4], %s248
        %s250 = sand.u32 %s141, 1
        %s251 = smul.addr %s250, 4
        %s252 = scalar_lea.vmem [#allocation7], %s251
        %v253 = vld [vmem:[%s222] sm:$0xff]
        %v254 = vld [vmem:[#allocation5] sm:$0xff]
        %v255 = vadd.f32 %v253, %v254
        %v256 = vld [vmem:[%s2] sm:$0x1]
        %v258 = vlaneseq
        %v259 = vshrl.u32 %v258, 7
        %v260 = vsub.s32 0, %v259
        %v261 = vrot.slane %v256, %v260
        %v263 = vadd.f32 %v255, %v261
        %v264 = vld [vmem:[%s3] sm:$0x1]
        %v265 = vld [vmem:[%s4] sm:$0x1]
        %266 = vadd.xlane.f32.xlu0 %v263
        %v267 = vpop.xlane.xlu0 %266
        %v268 = vrcp.pop 128.0
        %v269 = vmul.f32 %v267, %v268
        %v270 = vsub.f32 %v263, %v269
        %v271 = vmul.f32 %v270, %v270
        %272 = vadd.xlane.f32.xlu0 %v271
        %v273 = vpop.xlane.xlu0 %272
        %v274 = vmul.f32 %v273, %v268
        %v275 = vadd.f32 %v274, 1e-12
        %v276 = vrsqrt.pop %v275
        %v277 = vmul.f32 %v270, %v276
        %v279 = vlaneseq
        %v280 = vshrl.u32 %v279, 7
        %v281 = vsub.s32 0, %v280
        %v282 = vrot.slane %v264, %v281
        %v284 = vmul.f32 %v277, %v282
        %v286 = vlaneseq
        %v287 = vshrl.u32 %v286, 7
        %v288 = vsub.s32 0, %v287
        %v289 = vrot.slane %v265, %v288
        %v291 = vadd.f32 %v284, %v289
        %v292 = vpack.c.bf16 %v291, %v291
        %293 = vst [vmem:[%s252] sm:$0xf] %v292
        %s294 = sand.u32 %s141, 1
        %s295 = scalar_lea.sflag [#allocation4], %s294
        %s296 = sand.u32 %s141, 1
        %s297 = smul.addr %s296, 4
        %s298 = scalar_lea.vmem [#allocation7], %s297
        // Predicated region
        $region49: #{tpu_custom_call.1} parent=39 // pred_check
          %p299 = pneg %p151
        $region50: #{tpu_custom_call.1} parent=39 // pred_check_branch
          %301 = sbr.rel (%p299) target = $region52
        $region51: #{tpu_custom_call.1} parent=39 // pred_region
          %s303 = ssub.s32 64, 64
          %304 = vsyncadd %s295, %s303
          %s305 = smul.addr %s23, 64
          %s306 = scalar_lea.hbm %s5, %s305
          %s308 = sshll.u32 %s298, 4
          %s309 = int_to_ptr.vmem [resolvable:$true] %s308
          %311 = dma.vmem_to_hbm [thread:$0]  %s309, 64, %s306, %s295
        $region52: #{tpu_custom_call.1} parent=39 // pred_fallthru
          _
      $region40: #{tpu_custom_call.1} parent=5 // pred_fallthru
        _
      %p312 = scmp.le.s32.totalorder 2, %s18
      // Predicated region
      $region53: #{tpu_custom_call.1} parent=5 // pred_check
        %p313 = pneg %p312
      $region54: #{tpu_custom_call.1} parent=5 // pred_check_branch
        %315 = sbr.rel (%p313) target = $region56
      $region55: #{tpu_custom_call.1} parent=5 // pred_region
        %s316 = ssub.s32 %s18, 2
        // Predicated region
        $region57: #{tpu_custom_call.1} parent=55 // pred_check
          %p317 = pneg %p157
        $region58: #{tpu_custom_call.1} parent=55 // pred_check_branch
          %319 = sbr.rel (%p317) target = $region60
        $region59: #{tpu_custom_call.1} parent=55 // pred_region
          %s320 = sand.u32 %s142, 1
          %s321 = scalar_lea.sflag [#allocation4], %s320
          %s322 = sand.u32 %s142, 1
          %s323 = smul.addr %s322, 4
          %s324 = scalar_lea.vmem [#allocation7], %s323
          %325 = dma.done %s321, 64
        $region60: #{tpu_custom_call.1} parent=55 // pred_fallthru
          _
      $region56: #{tpu_custom_call.1} parent=5 // pred_fallthru
        _
    $region6: #{tpu_custom_call.1} parent=1 // loop_footer
      %s22 = sadd.s32 1, %s18
    $region7: #{tpu_custom_call.1} parent=1 // loop_footer_branch
      %17 = sbr.rel target = $region3
    $region8: #{tpu_custom_call.1} parent=1 // loop_exit
      _
    %326 = vsyncpa [#allocation3], 1
    %s327 = scalar_lea.sflag [#allocation3], 1
    %328 = vsyncpa %s327, 1
    %329 = vsyncpa [#allocation6], 1
    %330 = vsyncpa [#allocation4], 1
    %s331 = scalar_lea.sflag [#allocation4], 1
    %332 = vsyncpa %s331, 1

</llo_original>
